<compile_context>
chip_gen: v6e
topology: v6e:2x2x1
jax: 0.10.0
libtpu: 0.0.40
codegen_flags: <defaults>
</compile_context>

<pallas_src>
import functools

import jax
import jax.numpy as jnp
from jax.experimental import pallas as pl
from jax.experimental.pallas import tpu as pltpu


def _round_up(x, m):
    return ((x + m - 1) // m) * m


def _supports_bf16_vpu():
    # v6e / v7x have bf16 VALUs; v5e (and older) do not.
    try:
        kind = jax.devices()[0].device_kind.lower()
    except Exception:
        return False
    return ("v6" in kind) or ("v7" in kind)


def _pick_tile(HW, N, tile_hw, min_steps):
    """Pick a lane-dense spatial tile; avoid XLA pad/slice when possible."""
    tile_hw = max(128, (int(tile_hw) // 128) * 128)
    if HW % 128 == 0:
        # Tiles (multiples of 128 lanes) dividing H*W exactly -> no padding.
        cands = [t for t in range(128, min(tile_hw, HW) + 1, 128) if HW % t == 0]
        if cands:
            balanced = [t for t in cands if N * (HW // t) >= min_steps]
            return (max(balanced) if balanced else max(cands)), HW
    # Ragged H*W: fall back to padding the spatial tail.
    # TODO(synk): in-kernel masked store of the ragged last tile to avoid pad/slice.
    t = min(tile_hw, _round_up(HW, 128))
    while t > 128 and N * (_round_up(HW, t) // t) < min_steps:
        t -= 128
    return t, _round_up(HW, t)


def _classifier_fcn_kernel(x_ref, w1_ref, b1_ref, w2_ref, b2_ref, o_ref, *, chunk):
    # x_ref:  (C, T)          channels-major pixel tile (one batch element)
    # w1_ref: (hidden, C)     Conv2d(in_ch, hidden, k=1) weight (conv1 dtype)
    # b1_ref: (hidden, 1)     f32
    # w2_ref: (ncls, hidden)  Conv2d(hidden, ncls, k=1) weight (conv2 dtype)
    # b2_ref: (ncls, 1)       f32
    # o_ref:  (ncls, T)
    C, T = x_ref.shape
    hidden = w1_ref.shape[0]

    cd = w1_ref.dtype                      # conv1 compute dtype (bf16 v6e/v7x, f32 v5e)
    w1 = w1_ref[...]                       # (hidden, C)
    w2 = w2_ref[...]                       # (ncls, hidden)
    b2 = b2_ref[...].astype(jnp.float32)   # (ncls, 1)
    # Hoisted out of the chunk loop (JAX does not CSE broadcasts); doubles as
    # the accumulator initializer, saving one full (hidden, chunk) add pass.
    b1b = jnp.broadcast_to(b1_ref[...], (hidden, chunk)).astype(cd)

    n_chunks = T // chunk
    for j in range(n_chunks):
        # Static 256-lane sub-tiles: the per-chunk conv2 dot lets the LLO
        # scheduler hide the MXU work under the VALU-bound conv1.
        sl = slice(j * chunk, (j + 1) * chunk)
        x_c = x_ref[:, sl].astype(cd)                 # (C, chunk)

        if C <= 16:
            # conv1 on the VPU: C broadcast-FMAs (K=C far too small for MXU).
            acc = b1b
            for c in range(C):
                acc = acc + w1[:, c:c + 1] * x_c[c:c + 1, :]
        else:
            # Wide-input fallback: bf16 operands on the MXU, f32 accumulate.
            acc = jnp.dot(w1.astype(jnp.bfloat16), x_c.astype(jnp.bfloat16),
                          preferred_element_type=jnp.float32)
            acc = acc + b1b.astype(jnp.float32)

        # ReLU fused with the cast to the conv2 operand dtype; Dropout is the
        # identity in eval mode.
        h = jnp.maximum(acc, 0).astype(w2.dtype)
        out = jnp.dot(w2, h, preferred_element_type=jnp.float32) + b2
        o_ref[:, sl] = out.astype(o_ref.dtype)


def classifier_fcn_forward(x_nchw, w1, b1, w2, b2, *, tile_hw=4096,
                           min_grid_steps=4, conv1_dtype=None,
                           conv2_dtype=jnp.bfloat16):
    """x_nchw: (N, C_in, H, W) float32.
    w1: (hidden, C_in)  b1: (hidden,)   -- Conv2d(in_ch, hidden, k=1) params
    w2: (ncls, hidden)  b2: (ncls,)     -- Conv2d(hidden, ncls, k=1) params
    Returns (N, ncls, H, W).
    conv1_dtype: None -> auto (bf16 on v6e/v7x, f32 on v5e); pass jnp.float32
                 as a precision escape hatch.  conv2_dtype likewise (MXU dot).
    """
    N, C, H, W = x_nchw.shape
    hidden = w1.shape[0]
    ncls = w2.shape[0]
    HW = H * W

    if conv1_dtype is None:
        conv1_dtype = jnp.bfloat16 if _supports_bf16_vpu() else jnp.float32

    # Channels-major: (N, C, H*W) is a free (contiguous) reshape of NCHW.
    x_flat = x_nchw.reshape(N, C, HW)

    t, HW_pad = _pick_tile(HW, N, tile_hw, min_grid_steps)
    if HW_pad != HW:  # only pads when no 128-multiple tile divides H*W
        x_flat = jnp.pad(x_flat, ((0, 0), (0, 0), (0, HW_pad - HW)))
    grid = (N, HW_pad // t)

    # In-kernel lane chunking for MXU/VPU overlap; chunk always divides t.
    chunk = 256 if t % 256 == 0 else 128

    # Kernel-friendly parameter layouts.
    w1_k = w1.astype(conv1_dtype)                    # (hidden, C)   -- VPU path
    b1_k = b1.reshape(hidden, 1).astype(jnp.float32)
    w2_k = w2.astype(conv2_dtype)                    # (ncls, hidden) -- MXU
    b2_k = b2.reshape(ncls, 1).astype(jnp.float32)

    flops = int(2 * N * HW_pad * (C * hidden + hidden * ncls))
    bytes_accessed = int(
        N * C * HW_pad * 4 + N * ncls * HW_pad * 4
        + hidden * C * jnp.dtype(conv1_dtype).itemsize
        + ncls * hidden * jnp.dtype(conv2_dtype).itemsize
        + (hidden + ncls) * 4)

    kernel = functools.partial(_classifier_fcn_kernel, chunk=chunk)

    out = pl.pallas_call(
        kernel,
        out_shape=jax.ShapeDtypeStruct((N, ncls, HW_pad), x_nchw.dtype),
        grid_spec=pltpu.PrefetchScalarGridSpec(
            num_scalar_prefetch=0,
            grid=grid,
            in_specs=[
                pl.BlockSpec((None, C, t), lambda n, i: (n, 0, i)),   # x tile
                pl.BlockSpec((hidden, C), lambda n, i: (0, 0)),       # w1 (full)
                pl.BlockSpec((hidden, 1), lambda n, i: (0, 0)),       # b1 (full)
                pl.BlockSpec((ncls, hidden), lambda n, i: (0, 0)),    # w2 (full)
                pl.BlockSpec((ncls, 1), lambda n, i: (0, 0)),         # b2 (full)
            ],
            out_specs=pl.BlockSpec((None, ncls, t), lambda n, i: (n, 0, i)),
        ),
        compiler_params=pltpu.CompilerParams(
            dimension_semantics=("parallel", "parallel")),
        cost_estimate=pl.CostEstimate(
            flops=flops, transcendentals=0, bytes_accessed=bytes_accessed),
    )(x_flat, w1_k, b1_k, w2_k, b2_k)

    if HW_pad != HW:
        out = out[:, :, :HW]
    return out.reshape(N, ncls, H, W)


def _reference_forward(x_nchw, w1, b1, w2, b2):
    """Pure-JAX f32 reference matching the PyTorch module (eval mode)."""
    N, C, H, W = x_nchw.shape
    xr = jnp.transpose(x_nchw, (0, 2, 3, 1)).reshape(-1, C)
    h = jnp.maximum(xr @ w1.T + b1, 0.0)
    o = h @ w2.T + b2
    return o.reshape(N, H, W, -1).transpose(0, 3, 1, 2)


if __name__ == "__main__":
    # Small shapes consistent with the module: in_ch=4, layers_description=(256,),
    # num_classes=3, input NCHW (2, 4, 16, 16).
    N, in_ch, Hs, Ws = 2, 4, 16, 16
    hidden = 256
    num_classes = 3

    key = jax.random.PRNGKey(0)
    kx, kw1, kb1, kw2, kb2 = jax.random.split(key, 5)

    x = jax.random.normal(kx, (N, in_ch, Hs, Ws), dtype=jnp.float32)
    # Deterministic synthetic params (match Conv2d 1x1 param shapes).
    w1 = jax.random.normal(kw1, (hidden, in_ch), dtype=jnp.float32) * 0.1
    b1 = jax.random.normal(kb1, (hidden,), dtype=jnp.float32) * 0.1
    w2 = jax.random.normal(kw2, (num_classes, hidden), dtype=jnp.float32) * 0.1
    b2 = jax.random.normal(kb2, (num_classes,), dtype=jnp.float32) * 0.1

    out = classifier_fcn_forward(x, w1, b1, w2, b2)
    out = jax.block_until_ready(out)

    ref = _reference_forward(x, w1, b1, w2, b2)
    assert out.shape == (N, num_classes, Hs, Ws), out.shape
    # Tolerance accounts for bf16 operands on conv1 (v6e/v7x) and conv2
    # (accumulation stays f32 via preferred_element_type / f32 accumulator).
    assert jnp.allclose(out, ref, atol=3e-2, rtol=2e-2), "mismatch vs reference"

    print("KERNEL_OK")
</pallas_src>

<mosaic_0001>
module attributes {stable_mosaic.version = 11 : i64} {
  func.func @_classifier_fcn_kernel(%arg0: i32, %arg1: i32, %arg2: memref<1x4x128xf32, #tpu.memory_space<vmem>>, %arg3: memref<256x4xf32, #tpu.memory_space<vmem>>, %arg4: memref<256x1xf32, #tpu.memory_space<vmem>>, %arg5: memref<3x256xbf16, #tpu.memory_space<vmem>>, %arg6: memref<3x1xf32, #tpu.memory_space<vmem>>, %arg7: memref<1x3x128xf32, #tpu.memory_space<vmem>>) attributes {dimension_semantics = [#tpu.dimension_semantics<parallel>, #tpu.dimension_semantics<parallel>], iteration_bounds = array<i64: 2, 2>, scalar_prefetch = 0 : i64, scratch_operands = 0 : i64, tpu.core_type = #tpu.core_type<tc>, window_params = [{transform_indices = @transform_0, window_bounds = array<i64: 1, 4, 128>}, {pipeline_mode = #tpu.pipeline_mode<synchronous>, transform_indices = @transform_1, window_bounds = array<i64: 256, 4>}, {pipeline_mode = #tpu.pipeline_mode<synchronous>, transform_indices = @transform_2, window_bounds = array<i64: 256, 1>}, {pipeline_mode = #tpu.pipeline_mode<synchronous>, transform_indices = @transform_3, window_bounds = array<i64: 3, 256>}, {pipeline_mode = #tpu.pipeline_mode<synchronous>, transform_indices = @transform_4, window_bounds = array<i64: 3, 1>}, {transform_indices = @transform_5, window_bounds = array<i64: 1, 3, 128>}]} {
    %c0 = arith.constant 0 : index
    %c0_0 = arith.constant 0 : index
    %0 = vector.load %arg3[%c0, %c0_0] : memref<256x4xf32, #tpu.memory_space<vmem>>, vector<256x4xf32>
    %c0_1 = arith.constant 0 : index
    %c0_2 = arith.constant 0 : index
    %1 = vector.load %arg5[%c0_1, %c0_2] : memref<3x256xbf16, #tpu.memory_space<vmem>>, vector<3x256xbf16>
    %c0_3 = arith.constant 0 : index
    %c0_4 = arith.constant 0 : index
    %2 = vector.load %arg6[%c0_3, %c0_4] : memref<3x1xf32, #tpu.memory_space<vmem>>, vector<3x1xf32>
    %c0_5 = arith.constant 0 : index
    %c0_6 = arith.constant 0 : index
    %3 = vector.load %arg4[%c0_5, %c0_6] : memref<256x1xf32, #tpu.memory_space<vmem>>, vector<256x1xf32>
    %4 = vector.shape_cast %3 : vector<256x1xf32> to vector<256x1xf32>
    %5 = vector.broadcast %4 : vector<256x1xf32> to vector<256x128xf32>
    %c0_7 = arith.constant 0 : index
    %c0_8 = arith.constant 0 : index
    %c0_9 = arith.constant 0 : index
    %6 = vector.load %arg2[%c0_7, %c0_8, %c0_9] : memref<1x4x128xf32, #tpu.memory_space<vmem>>, vector<1x4x128xf32>
    %7 = vector.shape_cast %6 : vector<1x4x128xf32> to vector<4x128xf32>
    %8 = vector.extract_strided_slice %0 {offsets = [0, 0], sizes = [256, 1], strides = [1, 1]} : vector<256x4xf32> to vector<256x1xf32>
    %9 = vector.extract_strided_slice %7 {offsets = [0, 0], sizes = [1, 128], strides = [1, 1]} : vector<4x128xf32> to vector<1x128xf32>
    %10 = vector.broadcast %8 : vector<256x1xf32> to vector<256x128xf32>
    %11 = vector.broadcast %9 : vector<1x128xf32> to vector<256x128xf32>
    %12 = arith.mulf %10, %11 : vector<256x128xf32>
    %13 = arith.addf %5, %12 : vector<256x128xf32>
    %14 = vector.extract_strided_slice %0 {offsets = [0, 1], sizes = [256, 1], strides = [1, 1]} : vector<256x4xf32> to vector<256x1xf32>
    %15 = vector.extract_strided_slice %7 {offsets = [1, 0], sizes = [1, 128], strides = [1, 1]} : vector<4x128xf32> to vector<1x128xf32>
    %16 = vector.broadcast %14 : vector<256x1xf32> to vector<256x128xf32>
    %17 = vector.broadcast %15 : vector<1x128xf32> to vector<256x128xf32>
    %18 = arith.mulf %16, %17 : vector<256x128xf32>
    %19 = arith.addf %13, %18 : vector<256x128xf32>
    %20 = vector.extract_strided_slice %0 {offsets = [0, 2], sizes = [256, 1], strides = [1, 1]} : vector<256x4xf32> to vector<256x1xf32>
    %21 = vector.extract_strided_slice %7 {offsets = [2, 0], sizes = [1, 128], strides = [1, 1]} : vector<4x128xf32> to vector<1x128xf32>
    %22 = vector.broadcast %20 : vector<256x1xf32> to vector<256x128xf32>
    %23 = vector.broadcast %21 : vector<1x128xf32> to vector<256x128xf32>
    %24 = arith.mulf %22, %23 : vector<256x128xf32>
    %25 = arith.addf %19, %24 : vector<256x128xf32>
    %26 = vector.extract_strided_slice %0 {offsets = [0, 3], sizes = [256, 1], strides = [1, 1]} : vector<256x4xf32> to vector<256x1xf32>
    %27 = vector.extract_strided_slice %7 {offsets = [3, 0], sizes = [1, 128], strides = [1, 1]} : vector<4x128xf32> to vector<1x128xf32>
    %28 = vector.broadcast %26 : vector<256x1xf32> to vector<256x128xf32>
    %29 = vector.broadcast %27 : vector<1x128xf32> to vector<256x128xf32>
    %30 = arith.mulf %28, %29 : vector<256x128xf32>
    %31 = arith.addf %25, %30 : vector<256x128xf32>
    %cst = arith.constant 0.000000e+00 : f32
    %32 = vector.broadcast %cst : f32 to vector<256x128xf32>
    %33 = arith.maximumf %31, %32 : vector<256x128xf32>
    %34 = arith.truncf %33 : vector<256x128xf32> to vector<256x128xbf16>
    %cst_10 = arith.constant dense<0.000000e+00> : vector<3x128xf32>
    %35 = tpu.matmul %1, %34, %cst_10 {dimension_numbers = #tpu.dot_dimension_numbers<[1], [0], [0], [1], [0, 0, 1, 1], [], []>} : vector<3x256xbf16>, vector<256x128xbf16>, vector<3x128xf32> -> vector<3x128xf32>
    %36 = vector.broadcast %2 : vector<3x1xf32> to vector<3x128xf32>
    %37 = arith.addf %35, %36 : vector<3x128xf32>
    %c0_11 = arith.constant 0 : index
    %c0_12 = arith.constant 0 : index
    %c0_13 = arith.constant 0 : index
    %38 = vector.load %arg7[%c0_11, %c0_12, %c0_13] : memref<1x3x128xf32, #tpu.memory_space<vmem>>, vector<1x3x128xf32>
    %39 = vector.shape_cast %38 : vector<1x3x128xf32> to vector<3x128xf32>
    %40 = vector.shape_cast %37 : vector<3x128xf32> to vector<1x3x128xf32>
    tpu.vector_store %arg7[%c0_11, %c0_12, %c0_13], %40 {strides = array<i32>} : memref<1x3x128xf32, #tpu.memory_space<vmem>>, vector<1x3x128xf32>,
    return
  }
  func.func @transform_0(%arg0: i32, %arg1: i32) -> (i32, i32, i32) {
    %c0_i32 = arith.constant 0 : i32
    %c0_i32_0 = arith.constant 0 : i32
    return %arg0, %c0_i32, %arg1 : i32, i32, i32
  }
  func.func @transform_1(%arg0: i32, %arg1: i32) -> (i32, i32) {
    %c0_i32 = arith.constant 0 : i32
    %c0_i32_0 = arith.constant 0 : i32
    %c0_i32_1 = arith.constant 0 : i32
    return %c0_i32, %c0_i32_0 : i32, i32
  }
  func.func @transform_2(%arg0: i32, %arg1: i32) -> (i32, i32) {
    %c0_i32 = arith.constant 0 : i32
    %c0_i32_0 = arith.constant 0 : i32
    %c0_i32_1 = arith.constant 0 : i32
    return %c0_i32, %c0_i32_0 : i32, i32
  }
  func.func @transform_3(%arg0: i32, %arg1: i32) -> (i32, i32) {
    %c0_i32 = arith.constant 0 : i32
    %c0_i32_0 = arith.constant 0 : i32
    %c0_i32_1 = arith.constant 0 : i32
    return %c0_i32, %c0_i32_0 : i32, i32
  }
  func.func @transform_4(%arg0: i32, %arg1: i32) -> (i32, i32) {
    %c0_i32 = arith.constant 0 : i32
    %c0_i32_0 = arith.constant 0 : i32
    %c0_i32_1 = arith.constant 0 : i32
    return %c0_i32, %c0_i32_0 : i32, i32
  }
  func.func @transform_5(%arg0: i32, %arg1: i32) -> (i32, i32, i32) {
    %c0_i32 = arith.constant 0 : i32
    %c0_i32_0 = arith.constant 0 : i32
    return %arg0, %c0_i32, %arg1 : i32, i32, i32
  }
}

</mosaic_0001>

<llo_original>
// kernel: tpu_custom_call.1
$region0: #{tpu_custom_call.1}
  #allocation0 [shape = 'u32[]', space=smem, size = 0x4, offset = 0x4, fixed_abs, tag = 'smem constant byte address 0x4 - core index']
  #allocation1 [shape = 'u32[144,128]{1,0:T(1,128)}', space=vmem, size = 0x12000, scoped, tag = 'internal scratch']
  %s0 = inlined_call_operand.vmem [shape: f32[2,4,256], index: 0, kind: input, shape index: {}]
  %s1 = inlined_call_operand.vmem [shape: f32[256,4], index: 1, kind: input, shape index: {}]
  %s2 = inlined_call_operand.vmem [shape: f32[256,1], index: 2, kind: input, shape index: {}]
  %s3 = inlined_call_operand.vmem [shape: bf16[3,256], index: 3, kind: input, shape index: {}]
  %s4 = inlined_call_operand.vmem [shape: f32[3,1], index: 4, kind: input, shape index: {}]
  %s5 = inlined_call_operand.vmem [shape: f32[2,3,256], index: 5, kind: output, shape index: {}]
  %s6 = sld [smem:[#allocation0]]
  $region53: #{tpu_custom_call.1} parent=0
    _
  %s8 = ssub.s32 1, %s6
  %s9 = scalar_select 0, %s8, %s6
  loop: start=0, step=1, limit=6
  $region2: #{tpu_custom_call.1} parent=0 // loop_pre_header
    _
  $region3: #{tpu_custom_call.1} parent=0 // loop_header
    %s11 = sphi 0, %s15
    %p12 = scmp.ge.s32.totalorder %s11, 6
    %s18 = sphi 0, %s30
    %s19 = sphi 0, %s26
    %s20 = sphi 0, %s18
    %s21 = sphi 0, %s19
    %s22 = sphi 0, %s20
    %s23 = sphi 0, %s21
    %s35 = sphi 0, %s37
    %s38 = sphi 0, %s35
    %s39 = sphi 0, %s38
    %s55 = sphi 0, %s39
    %s59 = sphi 0, %s59
    %s61 = sphi 0, %s59
    %s62 = sphi 0, %s61
    %s76 = sphi 0, %s62
    %s80 = sphi 0, %s80
    %s82 = sphi 0, %s80
    %s83 = sphi 0, %s82
    %s97 = sphi 0, %s83
    %s101 = sphi 0, %s101
    %s103 = sphi 0, %s101
    %s104 = sphi 0, %s103
    %s118 = sphi 0, %s104
    %s122 = sphi 0, %s122
    %s124 = sphi 0, %s122
    %s125 = sphi 0, %s124
    %s139 = sphi 0, %s125
    %s147 = sphi 0, %s149
    %s150 = sphi 0, %s147
    %s151 = sphi 0, %s150
    %s167 = sphi 0, %s151
  $region4: #{tpu_custom_call.1} parent=0 // loop_header_branch
    %14 = sbr.rel (%p12) target = $region8
  $region5: #{tpu_custom_call.1} parent=0 // loop_body
    %s16 = ssub.s32 %s11, 1
    %s17 = ssub.s32 %s11, 2
    %s24 = sadd.s32 1, %s19
    %p25 = scmp.ge.s32.totalorder %s24, 2
    %s26 = scalar_select %p25, 0, %s24
    %s27 = sadd.s32 1, %s18
    %s28 = scalar_select %p25, %s27, %s18
    %p29 = scmp.ge.s32.totalorder %s28, 2
    %s30 = scalar_select %p29, 0, %s28
    %s31 = ssub.s32 %s18, %s30
    %s32 = ssub.s32 %s19, %s26
    %s33 = sor.u32 %s31, %s32
    %p34 = scmp.eq.s32.totalorder %s33, 0
    %s36 = sadd.s32 %s35, 1
    %s37 = scalar_select %p34, %s35, %s36
    %p40 = pneg %p34
    %p41 = scmp.eq.s32.totalorder %s11, 3
    %p42 = por %p40, %p41
    %p43 = scmp.ne.s32.totalorder %s35, %s38
    %p44 = scmp.eq.s32.totalorder %s11, 0
    %p45 = por %p43, %p44
    %p46 = scmp.ne.s32.totalorder %s35, %s38
    %p47 = scmp.eq.s32.totalorder %s16, 3
    %p48 = por %p46, %p47
    %p49 = scmp.ne.s32.totalorder %s38, %s39
    %p50 = scmp.eq.s32.totalorder %s16, 0
    %p51 = por %p49, %p50
    %p52 = scmp.ne.s32.totalorder %s38, %s39
    %p53 = scmp.eq.s32.totalorder %s17, 3
    %p54 = por %p52, %p53
    %p56 = scmp.ne.s32.totalorder %s39, %s55
    %p57 = scmp.eq.s32.totalorder %s17, 0
    %p58 = por %p56, %p57
    %s60 = sadd.s32 %s59, 1
    %p63 = scmp.eq.s32.totalorder %s11, 3
    %p64 = scmp.ne.s32.totalorder %s59, %s61
    %p65 = scmp.eq.s32.totalorder %s11, 0
    %p66 = por %p64, %p65
    %p67 = scmp.ne.s32.totalorder %s59, %s61
    %p68 = scmp.eq.s32.totalorder %s16, 3
    %p69 = por %p67, %p68
    %p70 = scmp.ne.s32.totalorder %s61, %s62
    %p71 = scmp.eq.s32.totalorder %s16, 0
    %p72 = por %p70, %p71
    %p73 = scmp.ne.s32.totalorder %s61, %s62
    %p74 = scmp.eq.s32.totalorder %s17, 3
    %p75 = por %p73, %p74
    %p77 = scmp.ne.s32.totalorder %s62, %s76
    %p78 = scmp.eq.s32.totalorder %s17, 0
    %p79 = por %p77, %p78
    %s81 = sadd.s32 %s80, 1
    %p84 = scmp.eq.s32.totalorder %s11, 3
    %p85 = scmp.ne.s32.totalorder %s80, %s82
    %p86 = scmp.eq.s32.totalorder %s11, 0
    %p87 = por %p85, %p86
    %p88 = scmp.ne.s32.totalorder %s80, %s82
    %p89 = scmp.eq.s32.totalorder %s16, 3
    %p90 = por %p88, %p89
    %p91 = scmp.ne.s32.totalorder %s82, %s83
    %p92 = scmp.eq.s32.totalorder %s16, 0
    %p93 = por %p91, %p92
    %p94 = scmp.ne.s32.totalorder %s82, %s83
    %p95 = scmp.eq.s32.totalorder %s17, 3
    %p96 = por %p94, %p95
    %p98 = scmp.ne.s32.totalorder %s83, %s97
    %p99 = scmp.eq.s32.totalorder %s17, 0
    %p100 = por %p98, %p99
    %s102 = sadd.s32 %s101, 1
    %p105 = scmp.eq.s32.totalorder %s11, 3
    %p106 = scmp.ne.s32.totalorder %s101, %s103
    %p107 = scmp.eq.s32.totalorder %s11, 0
    %p108 = por %p106, %p107
    %p109 = scmp.ne.s32.totalorder %s101, %s103
    %p110 = scmp.eq.s32.totalorder %s16, 3
    %p111 = por %p109, %p110
    %p112 = scmp.ne.s32.totalorder %s103, %s104
    %p113 = scmp.eq.s32.totalorder %s16, 0
    %p114 = por %p112, %p113
    %p115 = scmp.ne.s32.totalorder %s103, %s104
    %p116 = scmp.eq.s32.totalorder %s17, 3
    %p117 = por %p115, %p116
    %p119 = scmp.ne.s32.totalorder %s104, %s118
    %p120 = scmp.eq.s32.totalorder %s17, 0
    %p121 = por %p119, %p120
    %s123 = sadd.s32 %s122, 1
    %p126 = scmp.eq.s32.totalorder %s11, 3
    %p127 = scmp.ne.s32.totalorder %s122, %s124
    %p128 = scmp.eq.s32.totalorder %s11, 0
    %p129 = por %p127, %p128
    %p130 = scmp.ne.s32.totalorder %s122, %s124
    %p131 = scmp.eq.s32.totalorder %s16, 3
    %p132 = por %p130, %p131
    %p133 = scmp.ne.s32.totalorder %s124, %s125
    %p134 = scmp.eq.s32.totalorder %s16, 0
    %p135 = por %p133, %p134
    %p136 = scmp.ne.s32.totalorder %s124, %s125
    %p137 = scmp.eq.s32.totalorder %s17, 3
    %p138 = por %p136, %p137
    %p140 = scmp.ne.s32.totalorder %s125, %s139
    %p141 = scmp.eq.s32.totalorder %s17, 0
    %p142 = por %p140, %p141
    %s143 = ssub.s32 %s18, %s30
    %s144 = ssub.s32 %s19, %s26
    %s145 = sor.u32 %s143, %s144
    %p146 = scmp.eq.s32.totalorder %s145, 0
    %s148 = sadd.s32 %s147, 1
    %s149 = scalar_select %p146, %s147, %s148
    %p152 = pneg %p146
    %p153 = scmp.eq.s32.totalorder %s11, 3
    %p154 = por %p152, %p153
    %p155 = scmp.ne.s32.totalorder %s147, %s150
    %p156 = scmp.eq.s32.totalorder %s11, 0
    %p157 = por %p155, %p156
    %p158 = scmp.ne.s32.totalorder %s147, %s150
    %p159 = scmp.eq.s32.totalorder %s16, 3
    %p160 = por %p158, %p159
    %p161 = scmp.ne.s32.totalorder %s150, %s151
    %p162 = scmp.eq.s32.totalorder %s16, 0
    %p163 = por %p161, %p162
    %p164 = scmp.ne.s32.totalorder %s150, %s151
    %p165 = scmp.eq.s32.totalorder %s17, 3
    %p166 = por %p164, %p165
    %p168 = scmp.ne.s32.totalorder %s151, %s167
    %p169 = scmp.eq.s32.totalorder %s17, 0
    %p170 = por %p168, %p169
    %p171 = scmp.le.s32.totalorder 1, %s11
    %p172 = scmp.lt.s32.totalorder %s11, 5
    %p173 = pnand %p171, %p172
    %p174 = pneg %p173
    // Predicated region
    $region9: #{tpu_custom_call.1} parent=5 // pred_check
      _
    $region10: #{tpu_custom_call.1} parent=5 // pred_check_branch
      %176 = sbr.rel (%p173) target = $region12
    $region11: #{tpu_custom_call.1} parent=5 // pred_region
      %s177 = ssub.s32 %s11, 1
      // Predicated region
      $region13: #{tpu_custom_call.1} parent=11 // pred_check
        %p178 = pneg %p72
      $region14: #{tpu_custom_call.1} parent=11 // pred_check_branch
        %180 = sbr.rel (%p178) target = $region16
      $region15: #{tpu_custom_call.1} parent=11 // pred_region
        _
      $region16: #{tpu_custom_call.1} parent=11 // pred_fallthru
        _
      // Predicated region
      $region17: #{tpu_custom_call.1} parent=11 // pred_check
        %p181 = pneg %p93
      $region18: #{tpu_custom_call.1} parent=11 // pred_check_branch
        %183 = sbr.rel (%p181) target = $region20
      $region19: #{tpu_custom_call.1} parent=11 // pred_region
        _
      $region20: #{tpu_custom_call.1} parent=11 // pred_fallthru
        _
      // Predicated region
      $region21: #{tpu_custom_call.1} parent=11 // pred_check
        %p184 = pneg %p114
      $region22: #{tpu_custom_call.1} parent=11 // pred_check_branch
        %186 = sbr.rel (%p184) target = $region24
      $region23: #{tpu_custom_call.1} parent=11 // pred_region
        _
      $region24: #{tpu_custom_call.1} parent=11 // pred_fallthru
        _
      // Predicated region
      $region25: #{tpu_custom_call.1} parent=11 // pred_check
        %p187 = pneg %p135
      $region26: #{tpu_custom_call.1} parent=11 // pred_check_branch
        %189 = sbr.rel (%p187) target = $region28
      $region27: #{tpu_custom_call.1} parent=11 // pred_region
        _
      $region28: #{tpu_custom_call.1} parent=11 // pred_fallthru
        _
    $region12: #{tpu_custom_call.1} parent=5 // pred_fallthru
      _
    %p190 = scmp.lt.s32.totalorder %s11, 4
    // Predicated region
    $region29: #{tpu_custom_call.1} parent=5 // pred_check
      %p191 = pneg %p190
    $region30: #{tpu_custom_call.1} parent=5 // pred_check_branch
      %193 = sbr.rel (%p191) target = $region32
    $region31: #{tpu_custom_call.1} parent=5 // pred_region
      // Predicated region
      $region33: #{tpu_custom_call.1} parent=31 // pred_check
        %p194 = pneg %p45
      $region34: #{tpu_custom_call.1} parent=31 // pred_check_branch
        %196 = sbr.rel (%p194) target = $region36
      $region35: #{tpu_custom_call.1} parent=31 // pred_region
        %p197 = scmp.lt.s32.totalorder %s18, 1
        %s198 = scalar_select %p197, %s18, 1
        %p199 = scmp.lt.s32.totalorder %s19, 1
        %s200 = scalar_select %p199, %s19, 1
        %s201 = smul.addr %s198, 2
        %s202 = sadd.s32 %s200, %s201
        %s203 = smul.addr %s202, 4
        %s204 = scalar_lea.vmem %s0, %s203
      $region36: #{tpu_custom_call.1} parent=31 // pred_fallthru
        _
    $region32: #{tpu_custom_call.1} parent=5 // pred_fallthru
      _
    %p205 = scmp.le.s32.totalorder 1, %s11
    %p206 = scmp.lt.s32.totalorder %s11, 5
    %p207 = pnand %p205, %p206
    %p208 = pneg %p207
    // Predicated region
    $region37: #{tpu_custom_call.1} parent=5 // pred_check
      _
    $region38: #{tpu_custom_call.1} parent=5 // pred_check_branch
      %210 = sbr.rel (%p207) target = $region40
    $region39: #{tpu_custom_call.1} parent=5 // pred_region
      %s211 = ssub.s32 %s11, 1
      %p212 = scmp.lt.s32.totalorder %s20, 1
      %s213 = scalar_select %p212, %s20, 1
      %p214 = scmp.lt.s32.totalorder %s21, 1
      %s215 = scalar_select %p214, %s21, 1
      %s216 = smul.addr %s213, 2
      %s217 = sadd.s32 %s215, %s216
      %s218 = smul.addr %s217, 4
      %s219 = scalar_lea.vmem %s0, %s218
      %p220 = pneg %p51
      %p221 = pneg %p48
      %p222 = pneg %p72
      %p223 = pneg %p69
      %p224 = pneg %p93
      %p225 = pneg %p90
      %p226 = pneg %p114
      %p227 = pneg %p111
      %p228 = pneg %p135
      %p229 = pneg %p132
      %p230 = pneg %p163
      %p231 = pneg %p160
      %p232 = scmp.lt.s32.totalorder %s20, 1
      %s233 = scalar_select %p232, %s20, 1
      %p234 = scmp.lt.s32.totalorder %s21, 1
      %s235 = scalar_select %p234, %s21, 1
      %s236 = smul.addr %s233, 2
      %s237 = sadd.s32 %s235, %s236
      %s238 = smul.addr %s237, 4
      %s239 = scalar_lea.vmem %s5, %s238
      %p240 = scmp.lt.s32.totalorder %s20, 1
      %s241 = scalar_select %p240, %s20, 1
      %p242 = scmp.lt.s32.totalorder %s21, 1
      %s243 = scalar_select %p242, %s21, 1
      %s244 = smul.addr %s241, 2
      %s245 = sadd.s32 %s243, %s244
      %s246 = smul.addr %s245, 4
      %s247 = scalar_lea.vmem %s0, %s246
      %p248 = scmp.lt.s32.totalorder %s20, 1
      %s249 = scalar_select %p248, %s20, 1
      %p250 = scmp.lt.s32.totalorder %s21, 1
      %s251 = scalar_select %p250, %s21, 1
      %s252 = smul.addr %s249, 2
      %s253 = sadd.s32 %s251, %s252
      %s254 = smul.addr %s253, 4
      %s255 = scalar_lea.vmem %s5, %s254
      %v257 = vld [vmem:[%s1] sm:$0xff]
      %v258 = vld [vmem:[%s1 + $0x8] sm:$0xff]
      %v259 = vld [vmem:[%s1 + $0x10] sm:$0xff]
      %v260 = vld [vmem:[%s1 + $0x18] sm:$0xff]
      %v261 = vld [vmem:[%s1 + $0x20] sm:$0xff]
      %v262 = vld [vmem:[%s1 + $0x28] sm:$0xff]
      %v263 = vld [vmem:[%s1 + $0x30] sm:$0xff]
      %v264 = vld [vmem:[%s1 + $0x38] sm:$0xff]
      %v265 = vld [vmem:[%s1 + $0x40] sm:$0xff]
      %v266 = vld [vmem:[%s1 + $0x48] sm:$0xff]
      %v267 = vld [vmem:[%s1 + $0x50] sm:$0xff]
      %v268 = vld [vmem:[%s1 + $0x58] sm:$0xff]
      %v269 = vld [vmem:[%s1 + $0x60] sm:$0xff]
      %v270 = vld [vmem:[%s1 + $0x68] sm:$0xff]
      %v271 = vld [vmem:[%s1 + $0x70] sm:$0xff]
      %v272 = vld [vmem:[%s1 + $0x78] sm:$0xff]
      %v273 = vld [vmem:[%s1 + $0x80] sm:$0xff]
      %v274 = vld [vmem:[%s1 + $0x88] sm:$0xff]
      %v275 = vld [vmem:[%s1 + $0x90] sm:$0xff]
      %v276 = vld [vmem:[%s1 + $0x98] sm:$0xff]
      %v277 = vld [vmem:[%s1 + $0xa0] sm:$0xff]
      %v278 = vld [vmem:[%s1 + $0xa8] sm:$0xff]
      %v279 = vld [vmem:[%s1 + $0xb0] sm:$0xff]
      %v280 = vld [vmem:[%s1 + $0xb8] sm:$0xff]
      %v281 = vld [vmem:[%s1 + $0xc0] sm:$0xff]
      %v282 = vld [vmem:[%s1 + $0xc8] sm:$0xff]
      %v283 = vld [vmem:[%s1 + $0xd0] sm:$0xff]
      %v284 = vld [vmem:[%s1 + $0xd8] sm:$0xff]
      %v285 = vld [vmem:[%s1 + $0xe0] sm:$0xff]
      %v286 = vld [vmem:[%s1 + $0xe8] sm:$0xff]
      %v287 = vld [vmem:[%s1 + $0xf0] sm:$0xff]
      %v288 = vld [vmem:[%s1 + $0xf8] sm:$0xff]
      %v289 = vld [vmem:[%s3] sm:$0xf]
      %v290 = vld [vmem:[%s4] sm:$0x7]
      %v291 = vld [vmem:[%s2] sm:$0xff]
      %v292 = vld [vmem:[%s2 + $0x8] sm:$0xff]
      %v293 = vld [vmem:[%s2 + $0x10] sm:$0xff]
      %v294 = vld [vmem:[%s2 + $0x18] sm:$0xff]
      %v295 = vld [vmem:[%s2 + $0x20] sm:$0xff]
      %v296 = vld [vmem:[%s2 + $0x28] sm:$0xff]
      %v297 = vld [vmem:[%s2 + $0x30] sm:$0xff]
      %v298 = vld [vmem:[%s2 + $0x38] sm:$0xff]
      %v299 = vld [vmem:[%s2 + $0x40] sm:$0xff]
      %v300 = vld [vmem:[%s2 + $0x48] sm:$0xff]
      %v301 = vld [vmem:[%s2 + $0x50] sm:$0xff]
      %v302 = vld [vmem:[%s2 + $0x58] sm:$0xff]
      %v303 = vld [vmem:[%s2 + $0x60] sm:$0xff]
      %v304 = vld [vmem:[%s2 + $0x68] sm:$0xff]
      %v305 = vld [vmem:[%s2 + $0x70] sm:$0xff]
      %v306 = vld [vmem:[%s2 + $0x78] sm:$0xff]
      %v307 = vld [vmem:[%s2 + $0x80] sm:$0xff]
      %v308 = vld [vmem:[%s2 + $0x88] sm:$0xff]
      %v309 = vld [vmem:[%s2 + $0x90] sm:$0xff]
      %v310 = vld [vmem:[%s2 + $0x98] sm:$0xff]
      %v311 = vld [vmem:[%s2 + $0xa0] sm:$0xff]
      %v312 = vld [vmem:[%s2 + $0xa8] sm:$0xff]
      %v313 = vld [vmem:[%s2 + $0xb0] sm:$0xff]
      %v314 = vld [vmem:[%s2 + $0xb8] sm:$0xff]
      %v315 = vld [vmem:[%s2 + $0xc0] sm:$0xff]
      %v316 = vld [vmem:[%s2 + $0xc8] sm:$0xff]
      %v317 = vld [vmem:[%s2 + $0xd0] sm:$0xff]
      %v318 = vld [vmem:[%s2 + $0xd8] sm:$0xff]
      %v319 = vld [vmem:[%s2 + $0xe0] sm:$0xff]
      %v320 = vld [vmem:[%s2 + $0xe8] sm:$0xff]
      %v321 = vld [vmem:[%s2 + $0xf0] sm:$0xff]
      %v322 = vld [vmem:[%s2 + $0xf8] sm:$0xff]
      %324 = vset.pattern.permute.xlu0 0
      %325 = vperm.xlu0 %324, %v291
      %v326 = vpop.permute.xlu0 %325
      %329 = vset.pattern.permute.xlu0 0
      %330 = vperm.xlu0 %329, %v292
      %v331 = vpop.permute.xlu0 %330
      %334 = vset.pattern.permute.xlu0 0
      %335 = vperm.xlu0 %334, %v293
      %v336 = vpop.permute.xlu0 %335
      %339 = vset.pattern.permute.xlu0 0
      %340 = vperm.xlu0 %339, %v294
      %v341 = vpop.permute.xlu0 %340
      %344 = vset.pattern.permute.xlu0 0
      %345 = vperm.xlu0 %344, %v295
      %v346 = vpop.permute.xlu0 %345
      %349 = vset.pattern.permute.xlu0 0
      %350 = vperm.xlu0 %349, %v296
      %v351 = vpop.permute.xlu0 %350
      %354 = vset.pattern.permute.xlu0 0
      %355 = vperm.xlu0 %354, %v297
      %v356 = vpop.permute.xlu0 %355
      %359 = vset.pattern.permute.xlu0 0
      %360 = vperm.xlu0 %359, %v298
      %v361 = vpop.permute.xlu0 %360
      %364 = vset.pattern.permute.xlu0 0
      %365 = vperm.xlu0 %364, %v299
      %v366 = vpop.permute.xlu0 %365
      %369 = vset.pattern.permute.xlu0 0
      %370 = vperm.xlu0 %369, %v300
      %v371 = vpop.permute.xlu0 %370
      %374 = vset.pattern.permute.xlu0 0
      %375 = vperm.xlu0 %374, %v301
      %v376 = vpop.permute.xlu0 %375
      %379 = vset.pattern.permute.xlu0 0
      %380 = vperm.xlu0 %379, %v302
      %v381 = vpop.permute.xlu0 %380
      %384 = vset.pattern.permute.xlu0 0
      %385 = vperm.xlu0 %384, %v303
      %v386 = vpop.permute.xlu0 %385
      %389 = vset.pattern.permute.xlu0 0
      %390 = vperm.xlu0 %389, %v304
      %v391 = vpop.permute.xlu0 %390
      %394 = vset.pattern.permute.xlu0 0
      %395 = vperm.xlu0 %394, %v305
      %v396 = vpop.permute.xlu0 %395
      %399 = vset.pattern.permute.xlu0 0
      %400 = vperm.xlu0 %399, %v306
      %v401 = vpop.permute.xlu0 %400
      %404 = vset.pattern.permute.xlu0 0
      %405 = vperm.xlu0 %404, %v307
      %v406 = vpop.permute.xlu0 %405
      %409 = vset.pattern.permute.xlu0 0
      %410 = vperm.xlu0 %409, %v308
      %v411 = vpop.permute.xlu0 %410
      %414 = vset.pattern.permute.xlu0 0
      %415 = vperm.xlu0 %414, %v309
      %v416 = vpop.permute.xlu0 %415
      %419 = vset.pattern.permute.xlu0 0
      %420 = vperm.xlu0 %419, %v310
      %v421 = vpop.permute.xlu0 %420
      %424 = vset.pattern.permute.xlu0 0
      %425 = vperm.xlu0 %424, %v311
      %v426 = vpop.permute.xlu0 %425
      %429 = vset.pattern.permute.xlu0 0
      %430 = vperm.xlu0 %429, %v312
      %v431 = vpop.permute.xlu0 %430
      %434 = vset.pattern.permute.xlu0 0
      %435 = vperm.xlu0 %434, %v313
      %v436 = vpop.permute.xlu0 %435
      %439 = vset.pattern.permute.xlu0 0
      %440 = vperm.xlu0 %439, %v314
      %v441 = vpop.permute.xlu0 %440
      %444 = vset.pattern.permute.xlu0 0
      %445 = vperm.xlu0 %444, %v315
      %v446 = vpop.permute.xlu0 %445
      %449 = vset.pattern.permute.xlu0 0
      %450 = vperm.xlu0 %449, %v316
      %v451 = vpop.permute.xlu0 %450
      %454 = vset.pattern.permute.xlu0 0
      %455 = vperm.xlu0 %454, %v317
      %v456 = vpop.permute.xlu0 %455
      %459 = vset.pattern.permute.xlu0 0
      %460 = vperm.xlu0 %459, %v318
      %v461 = vpop.permute.xlu0 %460
      %464 = vset.pattern.permute.xlu0 0
      %465 = vperm.xlu0 %464, %v319
      %v466 = vpop.permute.xlu0 %465
      %469 = vset.pattern.permute.xlu0 0
      %470 = vperm.xlu0 %469, %v320
      %v471 = vpop.permute.xlu0 %470
      %474 = vset.pattern.permute.xlu0 0
      %475 = vperm.xlu0 %474, %v321
      %v476 = vpop.permute.xlu0 %475
      %479 = vset.pattern.permute.xlu0 0
      %480 = vperm.xlu0 %479, %v322
      %v481 = vpop.permute.xlu0 %480
      %v483 = vld [vmem:[%s247] sm:$0xf]
      %485 = vset.pattern.permute.xlu0 0
      %486 = vperm.xlu0 %485, %v257
      %v487 = vpop.permute.xlu0 %486
      %490 = vset.pattern.permute.xlu0 0
      %491 = vperm.xlu0 %490, %v258
      %v492 = vpop.permute.xlu0 %491
      %495 = vset.pattern.permute.xlu0 0
      %496 = vperm.xlu0 %495, %v259
      %v497 = vpop.permute.xlu0 %496
      %500 = vset.pattern.permute.xlu0 0
      %501 = vperm.xlu0 %500, %v260
      %v502 = vpop.permute.xlu0 %501
      %505 = vset.pattern.permute.xlu0 0
      %506 = vperm.xlu0 %505, %v261
      %v507 = vpop.permute.xlu0 %506
      %510 = vset.pattern.permute.xlu0 0
      %511 = vperm.xlu0 %510, %v262
      %v512 = vpop.permute.xlu0 %511
      %515 = vset.pattern.permute.xlu0 0
      %516 = vperm.xlu0 %515, %v263
      %v517 = vpop.permute.xlu0 %516
      %520 = vset.pattern.permute.xlu0 0
      %521 = vperm.xlu0 %520, %v264
      %v522 = vpop.permute.xlu0 %521
      %525 = vset.pattern.permute.xlu0 0
      %526 = vperm.xlu0 %525, %v265
      %v527 = vpop.permute.xlu0 %526
      %530 = vset.pattern.permute.xlu0 0
      %531 = vperm.xlu0 %530, %v266
      %v532 = vpop.permute.xlu0 %531
      %535 = vset.pattern.permute.xlu0 0
      %536 = vperm.xlu0 %535, %v267
      %v537 = vpop.permute.xlu0 %536
      %540 = vset.pattern.permute.xlu0 0
      %541 = vperm.xlu0 %540, %v268
      %v542 = vpop.permute.xlu0 %541
      %545 = vset.pattern.permute.xlu0 0
      %546 = vperm.xlu0 %545, %v269
      %v547 = vpop.permute.xlu0 %546
      %550 = vset.pattern.permute.xlu0 0
      %551 = vperm.xlu0 %550, %v270
      %v552 = vpop.permute.xlu0 %551
      %555 = vset.pattern.permute.xlu0 0
      %556 = vperm.xlu0 %555, %v271
      %v557 = vpop.permute.xlu0 %556
      %560 = vset.pattern.permute.xlu0 0
      %561 = vperm.xlu0 %560, %v272
      %v562 = vpop.permute.xlu0 %561
      %565 = vset.pattern.permute.xlu0 0
      %566 = vperm.xlu0 %565, %v273
      %v567 = vpop.permute.xlu0 %566
      %570 = vset.pattern.permute.xlu0 0
      %571 = vperm.xlu0 %570, %v274
      %v572 = vpop.permute.xlu0 %571
      %575 = vset.pattern.permute.xlu0 0
      %576 = vperm.xlu0 %575, %v275
      %v577 = vpop.permute.xlu0 %576
      %580 = vset.pattern.permute.xlu0 0
      %581 = vperm.xlu0 %580, %v276
      %v582 = vpop.permute.xlu0 %581
      %585 = vset.pattern.permute.xlu0 0
      %586 = vperm.xlu0 %585, %v277
      %v587 = vpop.permute.xlu0 %586
      %590 = vset.pattern.permute.xlu0 0
      %591 = vperm.xlu0 %590, %v278
      %v592 = vpop.permute.xlu0 %591
      %595 = vset.pattern.permute.xlu0 0
      %596 = vperm.xlu0 %595, %v279
      %v597 = vpop.permute.xlu0 %596
      %600 = vset.pattern.permute.xlu0 0
      %601 = vperm.xlu0 %600, %v280
      %v602 = vpop.permute.xlu0 %601
      %605 = vset.pattern.permute.xlu0 0
      %606 = vperm.xlu0 %605, %v281
      %v607 = vpop.permute.xlu0 %606
      %610 = vset.pattern.permute.xlu0 0
      %611 = vperm.xlu0 %610, %v282
      %v612 = vpop.permute.xlu0 %611
      %615 = vset.pattern.permute.xlu0 0
      %616 = vperm.xlu0 %615, %v283
      %v617 = vpop.permute.xlu0 %616
      %620 = vset.pattern.permute.xlu0 0
      %621 = vperm.xlu0 %620, %v284
      %v622 = vpop.permute.xlu0 %621
      %625 = vset.pattern.permute.xlu0 0
      %626 = vperm.xlu0 %625, %v285
      %v627 = vpop.permute.xlu0 %626
      %630 = vset.pattern.permute.xlu0 0
      %631 = vperm.xlu0 %630, %v286
      %v632 = vpop.permute.xlu0 %631
      %635 = vset.pattern.permute.xlu0 0
      %636 = vperm.xlu0 %635, %v287
      %v637 = vpop.permute.xlu0 %636
      %640 = vset.pattern.permute.xlu0 0
      %641 = vperm.xlu0 %640, %v288
      %v642 = vpop.permute.xlu0 %641
      %v644 = vlaneseq
      %v645 = vshrl.u32 %v644, 7
      %v646 = vsub.s32 0, %v645
      %v647 = vrot.slane %v483, %v646
      %v648 = vmul.f32 %v487, %v647
      %v649 = vmul.f32 %v492, %v647
      %v650 = vmul.f32 %v497, %v647
      %v651 = vmul.f32 %v502, %v647
      %v652 = vmul.f32 %v507, %v647
      %v653 = vmul.f32 %v512, %v647
      %v654 = vmul.f32 %v517, %v647
      %v655 = vmul.f32 %v522, %v647
      %v656 = vmul.f32 %v527, %v647
      %v657 = vmul.f32 %v532, %v647
      %v658 = vmul.f32 %v537, %v647
      %v659 = vmul.f32 %v542, %v647
      %v660 = vmul.f32 %v547, %v647
      %v661 = vmul.f32 %v552, %v647
      %v662 = vmul.f32 %v557, %v647
      %v663 = vmul.f32 %v562, %v647
      %v664 = vmul.f32 %v567, %v647
      %v665 = vmul.f32 %v572, %v647
      %v666 = vmul.f32 %v577, %v647
      %v667 = vmul.f32 %v582, %v647
      %v668 = vmul.f32 %v587, %v647
      %v669 = vmul.f32 %v592, %v647
      %v670 = vmul.f32 %v597, %v647
      %v671 = vmul.f32 %v602, %v647
      %v672 = vmul.f32 %v607, %v647
      %v673 = vmul.f32 %v612, %v647
      %v674 = vmul.f32 %v617, %v647
      %v675 = vmul.f32 %v622, %v647
      %v676 = vmul.f32 %v627, %v647
      %v677 = vmul.f32 %v632, %v647
      %v678 = vmul.f32 %v637, %v647
      %v679 = vmul.f32 %v642, %v647
      %v680 = vadd.f32 %v326, %v648
      %v681 = vadd.f32 %v331, %v649
      %v682 = vadd.f32 %v336, %v650
      %v683 = vadd.f32 %v341, %v651
      %v684 = vadd.f32 %v346, %v652
      %v685 = vadd.f32 %v351, %v653
      %v686 = vadd.f32 %v356, %v654
      %v687 = vadd.f32 %v361, %v655
      %v688 = vadd.f32 %v366, %v656
      %v689 = vadd.f32 %v371, %v657
      %v690 = vadd.f32 %v376, %v658
      %v691 = vadd.f32 %v381, %v659
      %v692 = vadd.f32 %v386, %v660
      %v693 = vadd.f32 %v391, %v661
      %v694 = vadd.f32 %v396, %v662
      %v695 = vadd.f32 %v401, %v663
      %v696 = vadd.f32 %v406, %v664
      %v697 = vadd.f32 %v411, %v665
      %v698 = vadd.f32 %v416, %v666
      %v699 = vadd.f32 %v421, %v667
      %v700 = vadd.f32 %v426, %v668
      %v701 = vadd.f32 %v431, %v669
      %v702 = vadd.f32 %v436, %v670
      %v703 = vadd.f32 %v441, %v671
      %v704 = vadd.f32 %v446, %v672
      %v705 = vadd.f32 %v451, %v673
      %v706 = vadd.f32 %v456, %v674
      %v707 = vadd.f32 %v461, %v675
      %v708 = vadd.f32 %v466, %v676
      %v709 = vadd.f32 %v471, %v677
      %v710 = vadd.f32 %v476, %v678
      %v711 = vadd.f32 %v481, %v679
      %712 = vset.pattern.permute.xlu0 1
      %713 = vperm.xlu0 %712, %v257
      %v714 = vpop.permute.xlu0 %713
      %716 = vset.pattern.permute.xlu0 1
      %717 = vperm.xlu0 %716, %v258
      %v718 = vpop.permute.xlu0 %717
      %720 = vset.pattern.permute.xlu0 1
      %721 = vperm.xlu0 %720, %v259
      %v722 = vpop.permute.xlu0 %721
      %724 = vset.pattern.permute.xlu0 1
      %725 = vperm.xlu0 %724, %v260
      %v726 = vpop.permute.xlu0 %725
      %728 = vset.pattern.permute.xlu0 1
      %729 = vperm.xlu0 %728, %v261
      %v730 = vpop.permute.xlu0 %729
      %732 = vset.pattern.permute.xlu0 1
      %733 = vperm.xlu0 %732, %v262
      %v734 = vpop.permute.xlu0 %733
      %736 = vset.pattern.permute.xlu0 1
      %737 = vperm.xlu0 %736, %v263
      %v738 = vpop.permute.xlu0 %737
      %740 = vset.pattern.permute.xlu0 1
      %741 = vperm.xlu0 %740, %v264
      %v742 = vpop.permute.xlu0 %741
      %744 = vset.pattern.permute.xlu0 1
      %745 = vperm.xlu0 %744, %v265
      %v746 = vpop.permute.xlu0 %745
      %748 = vset.pattern.permute.xlu0 1
      %749 = vperm.xlu0 %748, %v266
      %v750 = vpop.permute.xlu0 %749
      %752 = vset.pattern.permute.xlu0 1
      %753 = vperm.xlu0 %752, %v267
      %v754 = vpop.permute.xlu0 %753
      %756 = vset.pattern.permute.xlu0 1
      %757 = vperm.xlu0 %756, %v268
      %v758 = vpop.permute.xlu0 %757
      %760 = vset.pattern.permute.xlu0 1
      %761 = vperm.xlu0 %760, %v269
      %v762 = vpop.permute.xlu0 %761
      %764 = vset.pattern.permute.xlu0 1
      %765 = vperm.xlu0 %764, %v270
      %v766 = vpop.permute.xlu0 %765
      %768 = vset.pattern.permute.xlu0 1
      %769 = vperm.xlu0 %768, %v271
      %v770 = vpop.permute.xlu0 %769
      %772 = vset.pattern.permute.xlu0 1
      %773 = vperm.xlu0 %772, %v272
      %v774 = vpop.permute.xlu0 %773
      %776 = vset.pattern.permute.xlu0 1
      %777 = vperm.xlu0 %776, %v273
      %v778 = vpop.permute.xlu0 %777
      %780 = vset.pattern.permute.xlu0 1
      %781 = vperm.xlu0 %780, %v274
      %v782 = vpop.permute.xlu0 %781
      %784 = vset.pattern.permute.xlu0 1
      %785 = vperm.xlu0 %784, %v275
      %v786 = vpop.permute.xlu0 %785
      %788 = vset.pattern.permute.xlu0 1
      %789 = vperm.xlu0 %788, %v276
      %v790 = vpop.permute.xlu0 %789
      %792 = vset.pattern.permute.xlu0 1
      %793 = vperm.xlu0 %792, %v277
      %v794 = vpop.permute.xlu0 %793
      %796 = vset.pattern.permute.xlu0 1
      %797 = vperm.xlu0 %796, %v278
      %v798 = vpop.permute.xlu0 %797
      %800 = vset.pattern.permute.xlu0 1
      %801 = vperm.xlu0 %800, %v279
      %v802 = vpop.permute.xlu0 %801
      %804 = vset.pattern.permute.xlu0 1
      %805 = vperm.xlu0 %804, %v280
      %v806 = vpop.permute.xlu0 %805
      %808 = vset.pattern.permute.xlu0 1
      %809 = vperm.xlu0 %808, %v281
      %v810 = vpop.permute.xlu0 %809
      %812 = vset.pattern.permute.xlu0 1
      %813 = vperm.xlu0 %812, %v282
      %v814 = vpop.permute.xlu0 %813
      %816 = vset.pattern.permute.xlu0 1
      %817 = vperm.xlu0 %816, %v283
      %v818 = vpop.permute.xlu0 %817
      %820 = vset.pattern.permute.xlu0 1
      %821 = vperm.xlu0 %820, %v284
      %v822 = vpop.permute.xlu0 %821
      %824 = vset.pattern.permute.xlu0 1
      %825 = vperm.xlu0 %824, %v285
      %v826 = vpop.permute.xlu0 %825
      %828 = vset.pattern.permute.xlu0 1
      %829 = vperm.xlu0 %828, %v286
      %v830 = vpop.permute.xlu0 %829
      %832 = vset.pattern.permute.xlu0 1
      %833 = vperm.xlu0 %832, %v287
      %v834 = vpop.permute.xlu0 %833
      %836 = vset.pattern.permute.xlu0 1
      %837 = vperm.xlu0 %836, %v288
      %v838 = vpop.permute.xlu0 %837
      %v840 = vlaneseq
      %v841 = vshrl.u32 %v840, 7
      %v842 = vsub.s32 1, %v841
      %v843 = vrot.slane %v483, %v842
      %v844 = vmul.f32 %v714, %v843
      %v845 = vmul.f32 %v718, %v843
      %v846 = vmul.f32 %v722, %v843
      %v847 = vmul.f32 %v726, %v843
      %v848 = vmul.f32 %v730, %v843
      %v849 = vmul.f32 %v734, %v843
      %v850 = vmul.f32 %v738, %v843
      %v851 = vmul.f32 %v742, %v843
      %v852 = vmul.f32 %v746, %v843
      %v853 = vmul.f32 %v750, %v843
      %v854 = vmul.f32 %v754, %v843
      %v855 = vmul.f32 %v758, %v843
      %v856 = vmul.f32 %v762, %v843
      %v857 = vmul.f32 %v766, %v843
      %v858 = vmul.f32 %v770, %v843
      %v859 = vmul.f32 %v774, %v843
      %v860 = vmul.f32 %v778, %v843
      %v861 = vmul.f32 %v782, %v843
      %v862 = vmul.f32 %v786, %v843
      %v863 = vmul.f32 %v790, %v843
      %v864 = vmul.f32 %v794, %v843
      %v865 = vmul.f32 %v798, %v843
      %v866 = vmul.f32 %v802, %v843
      %v867 = vmul.f32 %v806, %v843
      %v868 = vmul.f32 %v810, %v843
      %v869 = vmul.f32 %v814, %v843
      %v870 = vmul.f32 %v818, %v843
      %v871 = vmul.f32 %v822, %v843
      %v872 = vmul.f32 %v826, %v843
      %v873 = vmul.f32 %v830, %v843
      %v874 = vmul.f32 %v834, %v843
      %v875 = vmul.f32 %v838, %v843
      %v876 = vadd.f32 %v680, %v844
      %v877 = vadd.f32 %v681, %v845
      %v878 = vadd.f32 %v682, %v846
      %v879 = vadd.f32 %v683, %v847
      %v880 = vadd.f32 %v684, %v848
      %v881 = vadd.f32 %v685, %v849
      %v882 = vadd.f32 %v686, %v850
      %v883 = vadd.f32 %v687, %v851
      %v884 = vadd.f32 %v688, %v852
      %v885 = vadd.f32 %v689, %v853
      %v886 = vadd.f32 %v690, %v854
      %v887 = vadd.f32 %v691, %v855
      %v888 = vadd.f32 %v692, %v856
      %v889 = vadd.f32 %v693, %v857
      %v890 = vadd.f32 %v694, %v858
      %v891 = vadd.f32 %v695, %v859
      %v892 = vadd.f32 %v696, %v860
      %v893 = vadd.f32 %v697, %v861
      %v894 = vadd.f32 %v698, %v862
      %v895 = vadd.f32 %v699, %v863
      %v896 = vadd.f32 %v700, %v864
      %v897 = vadd.f32 %v701, %v865
      %v898 = vadd.f32 %v702, %v866
      %v899 = vadd.f32 %v703, %v867
      %v900 = vadd.f32 %v704, %v868
      %v901 = vadd.f32 %v705, %v869
      %v902 = vadd.f32 %v706, %v870
      %v903 = vadd.f32 %v707, %v871
      %v904 = vadd.f32 %v708, %v872
      %v905 = vadd.f32 %v709, %v873
      %v906 = vadd.f32 %v710, %v874
      %v907 = vadd.f32 %v711, %v875
      %908 = vset.pattern.permute.xlu0 2
      %909 = vperm.xlu0 %908, %v257
      %v910 = vpop.permute.xlu0 %909
      %912 = vset.pattern.permute.xlu0 2
      %913 = vperm.xlu0 %912, %v258
      %v914 = vpop.permute.xlu0 %913
      %916 = vset.pattern.permute.xlu0 2
      %917 = vperm.xlu0 %916, %v259
      %v918 = vpop.permute.xlu0 %917
      %920 = vset.pattern.permute.xlu0 2
      %921 = vperm.xlu0 %920, %v260
      %v922 = vpop.permute.xlu0 %921
      %924 = vset.pattern.permute.xlu0 2
      %925 = vperm.xlu0 %924, %v261
      %v926 = vpop.permute.xlu0 %925
      %928 = vset.pattern.permute.xlu0 2
      %929 = vperm.xlu0 %928, %v262
      %v930 = vpop.permute.xlu0 %929
      %932 = vset.pattern.permute.xlu0 2
      %933 = vperm.xlu0 %932, %v263
      %v934 = vpop.permute.xlu0 %933
      %936 = vset.pattern.permute.xlu0 2
      %937 = vperm.xlu0 %936, %v264
      %v938 = vpop.permute.xlu0 %937
      %940 = vset.pattern.permute.xlu0 2
      %941 = vperm.xlu0 %940, %v265
      %v942 = vpop.permute.xlu0 %941
      %944 = vset.pattern.permute.xlu0 2
      %945 = vperm.xlu0 %944, %v266
      %v946 = vpop.permute.xlu0 %945
      %948 = vset.pattern.permute.xlu0 2
      %949 = vperm.xlu0 %948, %v267
      %v950 = vpop.permute.xlu0 %949
      %952 = vset.pattern.permute.xlu0 2
      %953 = vperm.xlu0 %952, %v268
      %v954 = vpop.permute.xlu0 %953
      %956 = vset.pattern.permute.xlu0 2
      %957 = vperm.xlu0 %956, %v269
      %v958 = vpop.permute.xlu0 %957
      %960 = vset.pattern.permute.xlu0 2
      %961 = vperm.xlu0 %960, %v270
      %v962 = vpop.permute.xlu0 %961
      %964 = vset.pattern.permute.xlu0 2
      %965 = vperm.xlu0 %964, %v271
      %v966 = vpop.permute.xlu0 %965
      %968 = vset.pattern.permute.xlu0 2
      %969 = vperm.xlu0 %968, %v272
      %v970 = vpop.permute.xlu0 %969
      %972 = vset.pattern.permute.xlu0 2
      %973 = vperm.xlu0 %972, %v273
      %v974 = vpop.permute.xlu0 %973
      %976 = vset.pattern.permute.xlu0 2
      %977 = vperm.xlu0 %976, %v274
      %v978 = vpop.permute.xlu0 %977
      %980 = vset.pattern.permute.xlu0 2
      %981 = vperm.xlu0 %980, %v275
      %v982 = vpop.permute.xlu0 %981
      %984 = vset.pattern.permute.xlu0 2
      %985 = vperm.xlu0 %984, %v276
      %v986 = vpop.permute.xlu0 %985
      %988 = vset.pattern.permute.xlu0 2
      %989 = vperm.xlu0 %988, %v277
      %v990 = vpop.permute.xlu0 %989
      %992 = vset.pattern.permute.xlu0 2
      %993 = vperm.xlu0 %992, %v278
      %v994 = vpop.permute.xlu0 %993
      %996 = vset.pattern.permute.xlu0 2
      %997 = vperm.xlu0 %996, %v279
      %v998 = vpop.permute.xlu0 %997
      %1000 = vset.pattern.permute.xlu0 2
      %1001 = vperm.xlu0 %1000, %v280
      %v1002 = vpop.permute.xlu0 %1001
      %1004 = vset.pattern.permute.xlu0 2
      %1005 = vperm.xlu0 %1004, %v281
      %v1006 = vpop.permute.xlu0 %1005
      %1008 = vset.pattern.permute.xlu0 2
      %1009 = vperm.xlu0 %1008, %v282
      %v1010 = vpop.permute.xlu0 %1009
      %1012 = vset.pattern.permute.xlu0 2
      %1013 = vperm.xlu0 %1012, %v283
      %v1014 = vpop.permute.xlu0 %1013
      %1016 = vset.pattern.permute.xlu0 2
      %1017 = vperm.xlu0 %1016, %v284
      %v1018 = vpop.permute.xlu0 %1017
      %1020 = vset.pattern.permute.xlu0 2
      %1021 = vperm.xlu0 %1020, %v285
      %v1022 = vpop.permute.xlu0 %1021
      %1024 = vset.pattern.permute.xlu0 2
      %1025 = vperm.xlu0 %1024, %v286
      %v1026 = vpop.permute.xlu0 %1025
      %1028 = vset.pattern.permute.xlu0 2
      %1029 = vperm.xlu0 %1028, %v287
      %v1030 = vpop.permute.xlu0 %1029
      %1032 = vset.pattern.permute.xlu0 2
      %1033 = vperm.xlu0 %1032, %v288
      %v1034 = vpop.permute.xlu0 %1033
      %v1036 = vlaneseq
      %v1037 = vshrl.u32 %v1036, 7
      %v1038 = vsub.s32 2, %v1037
      %v1039 = vrot.slane %v483, %v1038
      %v1040 = vmul.f32 %v910, %v1039
      %v1041 = vmul.f32 %v914, %v1039
      %v1042 = vmul.f32 %v918, %v1039
      %v1043 = vmul.f32 %v922, %v1039
      %v1044 = vmul.f32 %v926, %v1039
      %v1045 = vmul.f32 %v930, %v1039
      %v1046 = vmul.f32 %v934, %v1039
      %v1047 = vmul.f32 %v938, %v1039
      %v1048 = vmul.f32 %v942, %v1039
      %v1049 = vmul.f32 %v946, %v1039
      %v1050 = vmul.f32 %v950, %v1039
      %v1051 = vmul.f32 %v954, %v1039
      %v1052 = vmul.f32 %v958, %v1039
      %v1053 = vmul.f32 %v962, %v1039
      %v1054 = vmul.f32 %v966, %v1039
      %v1055 = vmul.f32 %v970, %v1039
      %v1056 = vmul.f32 %v974, %v1039
      %v1057 = vmul.f32 %v978, %v1039
      %v1058 = vmul.f32 %v982, %v1039
      %v1059 = vmul.f32 %v986, %v1039
      %v1060 = vmul.f32 %v990, %v1039
      %v1061 = vmul.f32 %v994, %v1039
      %v1062 = vmul.f32 %v998, %v1039
      %v1063 = vmul.f32 %v1002, %v1039
      %v1064 = vmul.f32 %v1006, %v1039
      %v1065 = vmul.f32 %v1010, %v1039
      %v1066 = vmul.f32 %v1014, %v1039
      %v1067 = vmul.f32 %v1018, %v1039
      %v1068 = vmul.f32 %v1022, %v1039
      %v1069 = vmul.f32 %v1026, %v1039
      %v1070 = vmul.f32 %v1030, %v1039
      %v1071 = vmul.f32 %v1034, %v1039
      %v1072 = vadd.f32 %v876, %v1040
      %v1073 = vadd.f32 %v877, %v1041
      %v1074 = vadd.f32 %v878, %v1042
      %v1075 = vadd.f32 %v879, %v1043
      %v1076 = vadd.f32 %v880, %v1044
      %v1077 = vadd.f32 %v881, %v1045
      %v1078 = vadd.f32 %v882, %v1046
      %v1079 = vadd.f32 %v883, %v1047
      %v1080 = vadd.f32 %v884, %v1048
      %v1081 = vadd.f32 %v885, %v1049
      %v1082 = vadd.f32 %v886, %v1050
      %v1083 = vadd.f32 %v887, %v1051
      %v1084 = vadd.f32 %v888, %v1052
      %v1085 = vadd.f32 %v889, %v1053
      %v1086 = vadd.f32 %v890, %v1054
      %v1087 = vadd.f32 %v891, %v1055
      %v1088 = vadd.f32 %v892, %v1056
      %v1089 = vadd.f32 %v893, %v1057
      %v1090 = vadd.f32 %v894, %v1058
      %v1091 = vadd.f32 %v895, %v1059
      %v1092 = vadd.f32 %v896, %v1060
      %v1093 = vadd.f32 %v897, %v1061
      %v1094 = vadd.f32 %v898, %v1062
      %v1095 = vadd.f32 %v899, %v1063
      %v1096 = vadd.f32 %v900, %v1064
      %v1097 = vadd.f32 %v901, %v1065
      %v1098 = vadd.f32 %v902, %v1066
      %v1099 = vadd.f32 %v903, %v1067
      %v1100 = vadd.f32 %v904, %v1068
      %v1101 = vadd.f32 %v905, %v1069
      %v1102 = vadd.f32 %v906, %v1070
      %v1103 = vadd.f32 %v907, %v1071
      %1104 = vset.pattern.permute.xlu0 3
      %1105 = vperm.xlu0 %1104, %v257
      %v1106 = vpop.permute.xlu0 %1105
      %1108 = vset.pattern.permute.xlu0 3
      %1109 = vperm.xlu0 %1108, %v258
      %v1110 = vpop.permute.xlu0 %1109
      %1112 = vset.pattern.permute.xlu0 3
      %1113 = vperm.xlu0 %1112, %v259
      %v1114 = vpop.permute.xlu0 %1113
      %1116 = vset.pattern.permute.xlu0 3
      %1117 = vperm.xlu0 %1116, %v260
      %v1118 = vpop.permute.xlu0 %1117
      %1120 = vset.pattern.permute.xlu0 3
      %1121 = vperm.xlu0 %1120, %v261
      %v1122 = vpop.permute.xlu0 %1121
      %1124 = vset.pattern.permute.xlu0 3
      %1125 = vperm.xlu0 %1124, %v262
      %v1126 = vpop.permute.xlu0 %1125
      %1128 = vset.pattern.permute.xlu0 3
      %1129 = vperm.xlu0 %1128, %v263
      %v1130 = vpop.permute.xlu0 %1129
      %1132 = vset.pattern.permute.xlu0 3
      %1133 = vperm.xlu0 %1132, %v264
      %v1134 = vpop.permute.xlu0 %1133
      %1136 = vset.pattern.permute.xlu0 3
      %1137 = vperm.xlu0 %1136, %v265
      %v1138 = vpop.permute.xlu0 %1137
      %1140 = vset.pattern.permute.xlu0 3
      %1141 = vperm.xlu0 %1140, %v266
      %v1142 = vpop.permute.xlu0 %1141
      %1144 = vset.pattern.permute.xlu0 3
      %1145 = vperm.xlu0 %1144, %v267
      %v1146 = vpop.permute.xlu0 %1145
      %1148 = vset.pattern.permute.xlu0 3
      %1149 = vperm.xlu0 %1148, %v268
      %v1150 = vpop.permute.xlu0 %1149
      %1152 = vset.pattern.permute.xlu0 3
      %1153 = vperm.xlu0 %1152, %v269
      %v1154 = vpop.permute.xlu0 %1153
      %1156 = vset.pattern.permute.xlu0 3
      %1157 = vperm.xlu0 %1156, %v270
      %v1158 = vpop.permute.xlu0 %1157
      %1160 = vset.pattern.permute.xlu0 3
      %1161 = vperm.xlu0 %1160, %v271
      %v1162 = vpop.permute.xlu0 %1161
      %1164 = vset.pattern.permute.xlu0 3
      %1165 = vperm.xlu0 %1164, %v272
      %v1166 = vpop.permute.xlu0 %1165
      %1168 = vset.pattern.permute.xlu0 3
      %1169 = vperm.xlu0 %1168, %v273
      %v1170 = vpop.permute.xlu0 %1169
      %1172 = vset.pattern.permute.xlu0 3
      %1173 = vperm.xlu0 %1172, %v274
      %v1174 = vpop.permute.xlu0 %1173
      %1176 = vset.pattern.permute.xlu0 3
      %1177 = vperm.xlu0 %1176, %v275
      %v1178 = vpop.permute.xlu0 %1177
      %1180 = vset.pattern.permute.xlu0 3
      %1181 = vperm.xlu0 %1180, %v276
      %v1182 = vpop.permute.xlu0 %1181
      %1184 = vset.pattern.permute.xlu0 3
      %1185 = vperm.xlu0 %1184, %v277
      %v1186 = vpop.permute.xlu0 %1185
      %1188 = vset.pattern.permute.xlu0 3
      %1189 = vperm.xlu0 %1188, %v278
      %v1190 = vpop.permute.xlu0 %1189
      %1192 = vset.pattern.permute.xlu0 3
      %1193 = vperm.xlu0 %1192, %v279
      %v1194 = vpop.permute.xlu0 %1193
      %1196 = vset.pattern.permute.xlu0 3
      %1197 = vperm.xlu0 %1196, %v280
      %v1198 = vpop.permute.xlu0 %1197
      %1200 = vset.pattern.permute.xlu0 3
      %1201 = vperm.xlu0 %1200, %v281
      %v1202 = vpop.permute.xlu0 %1201
      %1204 = vset.pattern.permute.xlu0 3
      %1205 = vperm.xlu0 %1204, %v282
      %v1206 = vpop.permute.xlu0 %1205
      %1208 = vset.pattern.permute.xlu0 3
      %1209 = vperm.xlu0 %1208, %v283
      %v1210 = vpop.permute.xlu0 %1209
      %1212 = vset.pattern.permute.xlu0 3
      %1213 = vperm.xlu0 %1212, %v284
      %v1214 = vpop.permute.xlu0 %1213
      %1216 = vset.pattern.permute.xlu0 3
      %1217 = vperm.xlu0 %1216, %v285
      %v1218 = vpop.permute.xlu0 %1217
      %1220 = vset.pattern.permute.xlu0 3
      %1221 = vperm.xlu0 %1220, %v286
      %v1222 = vpop.permute.xlu0 %1221
      %1224 = vset.pattern.permute.xlu0 3
      %1225 = vperm.xlu0 %1224, %v287
      %v1226 = vpop.permute.xlu0 %1225
      %1228 = vset.pattern.permute.xlu0 3
      %1229 = vperm.xlu0 %1228, %v288
      %v1230 = vpop.permute.xlu0 %1229
      %v1232 = vlaneseq
      %v1233 = vshrl.u32 %v1232, 7
      %v1234 = vsub.s32 3, %v1233
      %v1235 = vrot.slane %v483, %v1234
      %v1236 = vmul.f32 %v1106, %v1235
      %v1237 = vmul.f32 %v1110, %v1235
      %v1238 = vmul.f32 %v1114, %v1235
      %v1239 = vmul.f32 %v1118, %v1235
      %v1240 = vmul.f32 %v1122, %v1235
      %v1241 = vmul.f32 %v1126, %v1235
      %v1242 = vmul.f32 %v1130, %v1235
      %v1243 = vmul.f32 %v1134, %v1235
      %v1244 = vmul.f32 %v1138, %v1235
      %v1245 = vmul.f32 %v1142, %v1235
      %v1246 = vmul.f32 %v1146, %v1235
      %v1247 = vmul.f32 %v1150, %v1235
      %v1248 = vmul.f32 %v1154, %v1235
      %v1249 = vmul.f32 %v1158, %v1235
      %v1250 = vmul.f32 %v1162, %v1235
      %v1251 = vmul.f32 %v1166, %v1235
      %v1252 = vmul.f32 %v1170, %v1235
      %v1253 = vmul.f32 %v1174, %v1235
      %v1254 = vmul.f32 %v1178, %v1235
      %v1255 = vmul.f32 %v1182, %v1235
      %v1256 = vmul.f32 %v1186, %v1235
      %v1257 = vmul.f32 %v1190, %v1235
      %v1258 = vmul.f32 %v1194, %v1235
      %v1259 = vmul.f32 %v1198, %v1235
      %v1260 = vmul.f32 %v1202, %v1235
      %v1261 = vmul.f32 %v1206, %v1235
      %v1262 = vmul.f32 %v1210, %v1235
      %v1263 = vmul.f32 %v1214, %v1235
      %v1264 = vmul.f32 %v1218, %v1235
      %v1265 = vmul.f32 %v1222, %v1235
      %v1266 = vmul.f32 %v1226, %v1235
      %v1267 = vmul.f32 %v1230, %v1235
      %v1268 = vadd.f32 %v1072, %v1236
      %v1269 = vadd.f32 %v1073, %v1237
      %v1270 = vadd.f32 %v1074, %v1238
      %v1271 = vadd.f32 %v1075, %v1239
      %v1272 = vadd.f32 %v1076, %v1240
      %v1273 = vadd.f32 %v1077, %v1241
      %v1274 = vadd.f32 %v1078, %v1242
      %v1275 = vadd.f32 %v1079, %v1243
      %v1276 = vadd.f32 %v1080, %v1244
      %v1277 = vadd.f32 %v1081, %v1245
      %v1278 = vadd.f32 %v1082, %v1246
      %v1279 = vadd.f32 %v1083, %v1247
      %v1280 = vadd.f32 %v1084, %v1248
      %v1281 = vadd.f32 %v1085, %v1249
      %v1282 = vadd.f32 %v1086, %v1250
      %v1283 = vadd.f32 %v1087, %v1251
      %v1284 = vadd.f32 %v1088, %v1252
      %v1285 = vadd.f32 %v1089, %v1253
      %v1286 = vadd.f32 %v1090, %v1254
      %v1287 = vadd.f32 %v1091, %v1255
      %v1288 = vadd.f32 %v1092, %v1256
      %v1289 = vadd.f32 %v1093, %v1257
      %v1290 = vadd.f32 %v1094, %v1258
      %v1291 = vadd.f32 %v1095, %v1259
      %v1292 = vadd.f32 %v1096, %v1260
      %v1293 = vadd.f32 %v1097, %v1261
      %v1294 = vadd.f32 %v1098, %v1262
      %v1295 = vadd.f32 %v1099, %v1263
      %v1296 = vadd.f32 %v1100, %v1264
      %v1297 = vadd.f32 %v1101, %v1265
      %v1298 = vadd.f32 %v1102, %v1266
      %v1299 = vadd.f32 %v1103, %v1267
      %v1300 = vmax.f32 %v1268, 0.0
      %v1301 = vmax.f32 %v1269, 0.0
      %v1302 = vmax.f32 %v1270, 0.0
      %v1303 = vmax.f32 %v1271, 0.0
      %v1304 = vmax.f32 %v1272, 0.0
      %v1305 = vmax.f32 %v1273, 0.0
      %v1306 = vmax.f32 %v1274, 0.0
      %v1307 = vmax.f32 %v1275, 0.0
      %v1308 = vmax.f32 %v1276, 0.0
      %v1309 = vmax.f32 %v1277, 0.0
      %v1310 = vmax.f32 %v1278, 0.0
      %v1311 = vmax.f32 %v1279, 0.0
      %v1312 = vmax.f32 %v1280, 0.0
      %v1313 = vmax.f32 %v1281, 0.0
      %v1314 = vmax.f32 %v1282, 0.0
      %v1315 = vmax.f32 %v1283, 0.0
      %v1316 = vmax.f32 %v1284, 0.0
      %v1317 = vmax.f32 %v1285, 0.0
      %v1318 = vmax.f32 %v1286, 0.0
      %v1319 = vmax.f32 %v1287, 0.0
      %v1320 = vmax.f32 %v1288, 0.0
      %v1321 = vmax.f32 %v1289, 0.0
      %v1322 = vmax.f32 %v1290, 0.0
      %v1323 = vmax.f32 %v1291, 0.0
      %v1324 = vmax.f32 %v1292, 0.0
      %v1325 = vmax.f32 %v1293, 0.0
      %v1326 = vmax.f32 %v1294, 0.0
      %v1327 = vmax.f32 %v1295, 0.0
      %v1328 = vmax.f32 %v1296, 0.0
      %v1329 = vmax.f32 %v1297, 0.0
      %v1330 = vmax.f32 %v1298, 0.0
      %v1331 = vmax.f32 %v1299, 0.0
      %v1332 = vpack.c.bf16 %v1301, %v1300
      %v1333 = vpack.c.bf16 %v1303, %v1302
      %v1334 = vpack.c.bf16 %v1305, %v1304
      %v1335 = vpack.c.bf16 %v1307, %v1306
      %v1336 = vpack.c.bf16 %v1309, %v1308
      %v1337 = vpack.c.bf16 %v1311, %v1310
      %v1338 = vpack.c.bf16 %v1313, %v1312
      %v1339 = vpack.c.bf16 %v1315, %v1314
      %v1340 = vpack.c.bf16 %v1317, %v1316
      %v1341 = vpack.c.bf16 %v1319, %v1318
      %v1342 = vpack.c.bf16 %v1321, %v1320
      %v1343 = vpack.c.bf16 %v1323, %v1322
      %v1344 = vpack.c.bf16 %v1325, %v1324
      %v1345 = vpack.c.bf16 %v1327, %v1326
      %v1346 = vpack.c.bf16 %v1329, %v1328
      %v1347 = vpack.c.bf16 %v1331, %v1330
      %1349 = vset.pattern.permute.xlu0 0
      %1350 = vperm.xlu0 %1349, %v290
      %v1351 = vpop.permute.xlu0 %1350
      %v1355 = vunpack.c.l.s4 1983009808
      %v1356 = vunpack.c.0.s8 %v1355
      %v1357 = vlaneseq
      %v1358 = vshrl.u32 %v1357, 7
      %v1359 = vsub.s32 %v1356, %v1358
      %v1360 = vrot.slane %v289, %v1359
      %v1361 = vcombine.high %v1360, %v1360
      %1364 = vmatprep.subr.bf16.mxu0 0
      %1365 = vmatpush1.bf16.msra.mxu0 %v1339
      %1366 = vmatprep.subr.bf16.mxu0 0
      %1367 = vmatpush1.bf16.msra.mxu0 %v1338
      %1368 = vmatprep.subr.bf16.mxu0 0
      %1369 = vmatpush1.bf16.msra.mxu0 %v1337
      %1370 = vmatprep.subr.bf16.mxu0 0
      %1371 = vmatpush1.bf16.msra.mxu0 %v1336
      %1372 = vmatprep.subr.bf16.mxu0 0
      %1373 = vmatpush1.bf16.msra.mxu0 %v1335
      %1374 = vmatprep.subr.bf16.mxu0 0
      %1375 = vmatpush1.bf16.msra.mxu0 %v1334
      %1376 = vmatprep.subr.bf16.mxu0 0
      %1377 = vmatpush1.bf16.msra.mxu0 %v1333
      %1378 = vmatprep.subr.bf16.mxu0 0
      %1379 = vmatpush1.bf16.msra.mxu0 %v1332
      %1380 = vmatprep.subr.bf16.mxu0 0
      %1381 = vmatpush2.bf16.msra.mxu0 %v1347
      %1382 = vmatprep.subr.bf16.mxu0 0
      %1383 = vmatpush2.bf16.msra.mxu0 %v1346
      %1384 = vmatprep.subr.bf16.mxu0 0
      %1385 = vmatpush2.bf16.msra.mxu0 %v1345
      %1386 = vmatprep.subr.bf16.mxu0 0
      %1387 = vmatpush2.bf16.msra.mxu0 %v1344
      %1388 = vmatprep.subr.bf16.mxu0 0
      %1389 = vmatpush2.bf16.msra.mxu0 %v1343
      %1390 = vmatprep.subr.bf16.mxu0 0
      %1391 = vmatpush2.bf16.msra.mxu0 %v1342
      %1392 = vmatprep.subr.bf16.mxu0 0
      %1393 = vmatpush2.bf16.msra.mxu0 %v1341
      %1394 = vmatprep.subr.bf16.mxu0 0
      %1395 = vmatpush2.bf16.msra.mxu0 %v1340
      %1396 = vmatprep.mubr.bf16.mxu0 %v1361
      %1397 = vmatmul.mubr.bf16.gmra.mxu0 %v1360
      %v1398 = vpop.f32.mrf.mxu0
      %v1399 = vadd.f32 %v1351, %v1398
      %v1400 = vpop.f32.mrf.mxu0
      %v1401 = vpop.f32.mrf.mxu0
      %v1402 = vpop.f32.mrf.mxu0
      %1403 = vdwg.mxu0
      %1404 = vst [vmem:[%s255] sm:$0x7] %v1399
      %p1405 = scmp.lt.s32.totalorder %s20, 1
      %s1406 = scalar_select %p1405, %s20, 1
      %p1407 = scmp.lt.s32.totalorder %s21, 1
      %s1408 = scalar_select %p1407, %s21, 1
      %s1409 = smul.addr %s1406, 2
      %s1410 = sadd.s32 %s1408, %s1409
      %s1411 = smul.addr %s1410, 4
      %s1412 = scalar_lea.vmem %s5, %s1411
      // Predicated region
      $region41: #{tpu_custom_call.1} parent=39 // pred_check
        %p1413 = pneg %p160
      $region42: #{tpu_custom_call.1} parent=39 // pred_check_branch
        %1415 = sbr.rel (%p1413) target = $region44
      $region43: #{tpu_custom_call.1} parent=39 // pred_region
        _
      $region44: #{tpu_custom_call.1} parent=39 // pred_fallthru
        _
    $region40: #{tpu_custom_call.1} parent=5 // pred_fallthru
      _
    %p1416 = scmp.le.s32.totalorder 2, %s11
    // Predicated region
    $region45: #{tpu_custom_call.1} parent=5 // pred_check
      %p1417 = pneg %p1416
    $region46: #{tpu_custom_call.1} parent=5 // pred_check_branch
      %1419 = sbr.rel (%p1417) target = $region48
    $region47: #{tpu_custom_call.1} parent=5 // pred_region
      %s1420 = ssub.s32 %s11, 2
      // Predicated region
      $region49: #{tpu_custom_call.1} parent=47 // pred_check
        %p1421 = pneg %p166
      $region50: #{tpu_custom_call.1} parent=47 // pred_check_branch
        %1423 = sbr.rel (%p1421) target = $region52
      $region51: #{tpu_custom_call.1} parent=47 // pred_region
        %p1424 = scmp.lt.s32.totalorder %s22, 1
        %s1425 = scalar_select %p1424, %s22, 1
        %p1426 = scmp.lt.s32.totalorder %s23, 1
        %s1427 = scalar_select %p1426, %s23, 1
        %s1428 = smul.addr %s1425, 2
        %s1429 = sadd.s32 %s1427, %s1428
        %s1430 = smul.addr %s1429, 4
        %s1431 = scalar_lea.vmem %s5, %s1430
      $region52: #{tpu_custom_call.1} parent=47 // pred_fallthru
        _
    $region48: #{tpu_custom_call.1} parent=5 // pred_fallthru
      _
  $region6: #{tpu_custom_call.1} parent=0 // loop_footer
    %s15 = sadd.s32 1, %s11
  $region7: #{tpu_custom_call.1} parent=0 // loop_footer_branch
    %10 = sbr.rel target = $region3
  $region8: #{tpu_custom_call.1} parent=0 // loop_exit
    _

</llo_original>
